<compile_context>
chip_gen: v7x
topology: tpu7x:2x2x1
jax: 0.10.0
libtpu: 0.0.40
codegen_flags: <defaults>
</compile_context>

<pallas_src>
import functools
import numpy as np
import jax
import jax.numpy as jnp
from jax import lax
from jax.experimental import pallas as pl
from jax.experimental.pallas import tpu as pltpu

_LANE = 128


def _vmem_limit_bytes():
    """~75% of physical VMEM (64 MiB on v7x, 128 MiB on v5e/v6e), capped at 96 MB."""
    cap = 64 * 1024 * 1024
    try:
        info = pltpu.get_tpu_info()
        cap = int(getattr(info, "vmem_capacity_bytes", cap))
    except Exception:
        pass
    return int(min(cap * 3 // 4, 96 * 1024 * 1024))


def _pick_hw_tile(hw, cin, cout, x_itemsize, vmem_budget_bytes):
    """Spatial (lane-axis) tile: 128-multiple, a few MiB, >= ~8 grid steps when possible."""
    per_col = 2 * (cin * x_itemsize + cout * 4)      # double-buffered x-tile + f32 out-tile
    by_vmem = vmem_budget_bytes // max(per_col, 1)
    by_steps = pl.cdiv(hw, 8)                        # aim for >= ~8 spatial steps
    t = min(by_vmem, by_steps, 16 * 1024)            # absolute cap keeps tiles a few MiB
    t = max(_LANE, (t // _LANE) * _LANE)
    return hw if t >= hw else t                      # full-dim block when hw is small


# ------------------------------ Pallas kernel ------------------------------

def _conv1x1_kernel(x_ref, w_ref, b_ref, o_ref, *, precision):
    # x_ref: (1, Cin, T)   activations, spatial on the 128-lane axis
    # w_ref: (Cout, Cin)   weights (VMEM-resident across the whole grid)
    # b_ref: (Cout, 1)     bias
    # o_ref: (1, Cout, T)  output, spatial lane-dense, Cout on sublanes
    y = jnp.dot(w_ref[...], x_ref[0],
                preferred_element_type=jnp.float32, precision=precision)
    o_ref[0] = (y + b_ref[...]).astype(o_ref.dtype)


def outconv_forward_flat(x_flat, w_mat, bias, *, hw_tile=None,
                         precision=lax.Precision.HIGHEST):
    """x_flat: (N, Cin, HW); w_mat: (Cout, Cin); bias: (Cout,). Returns (N, Cout, HW) f32."""
    N, Cin, HW = x_flat.shape
    Cout = w_mat.shape[0]
    b_col = bias.astype(jnp.float32).reshape(Cout, 1)

    vmem_limit = _vmem_limit_bytes()
    t = hw_tile if hw_tile is not None else _pick_hw_tile(
        HW, Cin, Cout, x_flat.dtype.itemsize, vmem_limit // 3)
    grid_hw = pl.cdiv(HW, t)                         # last block masked if HW % t != 0

    kernel = functools.partial(_conv1x1_kernel, precision=precision)
    return pl.pallas_call(
        kernel,
        out_shape=jax.ShapeDtypeStruct((N, Cout, HW), jnp.float32),
        grid_spec=pltpu.PrefetchScalarGridSpec(
            num_scalar_prefetch=0,
            grid=(N, grid_hw),                       # spatial innermost; w/b stay resident
            in_specs=[
                pl.BlockSpec((1, Cin, t), lambda n, s: (n, 0, s)),
                pl.BlockSpec((Cout, Cin), lambda n, s: (0, 0)),
                pl.BlockSpec((Cout, 1), lambda n, s: (0, 0)),
            ],
            out_specs=pl.BlockSpec((1, Cout, t), lambda n, s: (n, 0, s)),
        ),
        compiler_params=pltpu.CompilerParams(
            dimension_semantics=("parallel", "parallel"),
            vmem_limit_bytes=vmem_limit),
    )(x_flat, w_mat, b_col)


@functools.partial(jax.jit, static_argnames=("hw_tile", "use_bf16_inputs"))
def outconv_forward(params, x_nchw, hw_tile=None, use_bf16_inputs=False):
    """PyTorch OutConv.forward: y = Conv2d(Cin, Cout, kernel_size=1)(x). NCHW in/out."""
    w, b = params["w"], params["b"]                  # (Cout, Cin, 1, 1), (Cout,)
    N, Cin, H, W = x_nchw.shape
    Cout = w.shape[0]
    w_mat = w[:, :, 0, 0]                            # (Cout, Cin)
    if use_bf16_inputs:                              # opt-in: halves input HBM reads
        x = x_nchw.astype(jnp.bfloat16)
        w_mat = w_mat.astype(jnp.bfloat16)
        precision = None
    else:
        x = x_nchw.astype(jnp.float32)
        w_mat = w_mat.astype(jnp.float32)
        precision = lax.Precision.HIGHEST            # faithful to PyTorch f32 Conv2d
    x_flat = x.reshape(N, Cin, H * W)                # free metadata reshape (contiguous NCHW)
    y = outconv_forward_flat(x_flat, w_mat, b, hw_tile=hw_tile, precision=precision)
    return y.reshape(N, Cout, H, W)                  # free reshape back to NCHW


# ----------------------------- params & reference ---------------------------

def init_outconv_params(key, cin, cout):
    # PyTorch Conv2d default init: U(-1/sqrt(fan_in), 1/sqrt(fan_in)), fan_in = cin*1*1
    kw, kb = jax.random.split(key)
    bound = 1.0 / np.sqrt(cin)
    return {"w": jax.random.uniform(kw, (cout, cin, 1, 1), jnp.float32, -bound, bound),
            "b": jax.random.uniform(kb, (cout,), jnp.float32, -bound, bound)}


def np_outconv(params, x_nchw):
    x = np.asarray(x_nchw, np.float64)
    w = np.asarray(params["w"], np.float64)[:, :, 0, 0]
    b = np.asarray(params["b"], np.float64)
    return np.einsum("nchw,oc->nohw", x, w) + b[None, :, None, None]


def _check(out, ref, tag, tol=1e-4):
    err = float(np.max(np.abs(np.asarray(out, np.float64) - ref)))
    scl = float(np.max(np.abs(ref))) + 1e-8
    if err / scl > tol:
        raise AssertionError(f"{tag} mismatch: max_abs_err={err:.3e}, ref_scale={scl:.3e}")


# ---------------------------------- main ------------------------------------

if __name__ == "__main__":
    key = jax.random.PRNGKey(0)
    k1, k2, k3, k4, k5 = jax.random.split(key, 5)

    # Test A: spec shapes -- OutConv(4, 3) on x: (2, 4, 16, 16) NCHW.
    pA = init_outconv_params(k1, 4, 3)
    xA = jax.random.normal(k2, (2, 4, 16, 16), jnp.float32)
    outA = jax.block_until_ready(outconv_forward(pA, xA))
    assert outA.shape == (2, 3, 16, 16), outA.shape
    _check(outA, np_outconv(pA, xA), "test A")

    # Test B: larger channels + HW=360 not a multiple of the 128 spatial tile
    # (exercises the masked last block and a multi-step spatial grid).
    pB = init_outconv_params(k3, 64, 260)
    xB = jax.random.normal(k4, (1, 64, 18, 20), jnp.float32)
    outB = jax.block_until_ready(outconv_forward(pB, xB, hw_tile=128))
    assert outB.shape == (1, 260, 18, 20), outB.shape
    _check(outB, np_outconv(pB, xB), "test B")

    # Test C: tiny spatial extent (HW=64 < 128) -> single full-dim spatial block.
    xC = jax.random.normal(k5, (1, 4, 8, 8), jnp.float32)
    outC = jax.block_until_ready(outconv_forward(pA, xC))
    assert outC.shape == (1, 3, 8, 8), outC.shape
    _check(outC, np_outconv(pA, xC), "test C")

    # Test D: opt-in bf16 input path (loose tolerance; accumulation stays f32).
    outD = jax.block_until_ready(outconv_forward(pA, xA, use_bf16_inputs=True))
    _check(outD, np_outconv(pA, xA), "test D (bf16 inputs)", tol=5e-2)

    print("KERNEL_OK")
</pallas_src>

<mosaic_0001>
module attributes {stable_mosaic.version = 11 : i64} {
  func.func @_conv1x1_kernel(%arg0: i32, %arg1: i32, %arg2: memref<1x4x128xf32, #tpu.memory_space<vmem>>, %arg3: memref<3x4xf32, #tpu.memory_space<vmem>>, %arg4: memref<3x1xf32, #tpu.memory_space<vmem>>, %arg5: memref<1x3x128xf32, #tpu.memory_space<vmem>>) attributes {dimension_semantics = [#tpu.dimension_semantics<parallel>, #tpu.dimension_semantics<parallel>], iteration_bounds = array<i64: 2, 2>, scalar_prefetch = 0 : i64, scratch_operands = 0 : i64, tpu.core_type = #tpu.core_type<tc>, window_params = [{transform_indices = @transform_0, window_bounds = array<i64: 1, 4, 128>}, {pipeline_mode = #tpu.pipeline_mode<synchronous>, transform_indices = @transform_1, window_bounds = array<i64: 3, 4>}, {pipeline_mode = #tpu.pipeline_mode<synchronous>, transform_indices = @transform_2, window_bounds = array<i64: 3, 1>}, {transform_indices = @transform_3, window_bounds = array<i64: 1, 3, 128>}]} {
    %c0 = arith.constant 0 : index
    %c0_0 = arith.constant 0 : index
    %0 = vector.load %arg3[%c0, %c0_0] : memref<3x4xf32, #tpu.memory_space<vmem>>, vector<3x4xf32>
    %c0_1 = arith.constant 0 : index
    %c0_2 = arith.constant 0 : index
    %c0_3 = arith.constant 0 : index
    %1 = vector.load %arg2[%c0_1, %c0_2, %c0_3] : memref<1x4x128xf32, #tpu.memory_space<vmem>>, vector<1x4x128xf32>
    %2 = vector.shape_cast %1 : vector<1x4x128xf32> to vector<4x128xf32>
    %cst = arith.constant dense<0.000000e+00> : vector<3x128xf32>
    %3 = tpu.matmul %0, %2, %cst {dimension_numbers = #tpu.dot_dimension_numbers<[1], [0], [0], [1], [0, 0, 1, 1], [], []>, precision = #tpu.contract_precision<fp32>} : vector<3x4xf32>, vector<4x128xf32>, vector<3x128xf32> -> vector<3x128xf32>
    %c0_4 = arith.constant 0 : index
    %c0_5 = arith.constant 0 : index
    %4 = vector.load %arg4[%c0_4, %c0_5] : memref<3x1xf32, #tpu.memory_space<vmem>>, vector<3x1xf32>
    %5 = vector.broadcast %4 : vector<3x1xf32> to vector<3x128xf32>
    %6 = arith.addf %3, %5 : vector<3x128xf32>
    %c0_6 = arith.constant 0 : index
    %c0_7 = arith.constant 0 : index
    %c0_8 = arith.constant 0 : index
    %7 = vector.load %arg5[%c0_6, %c0_7, %c0_8] : memref<1x3x128xf32, #tpu.memory_space<vmem>>, vector<1x3x128xf32>
    %8 = vector.shape_cast %7 : vector<1x3x128xf32> to vector<3x128xf32>
    %9 = vector.shape_cast %6 : vector<3x128xf32> to vector<1x3x128xf32>
    tpu.vector_store %arg5[%c0_6, %c0_7, %c0_8], %9 {strides = array<i32>} : memref<1x3x128xf32, #tpu.memory_space<vmem>>, vector<1x3x128xf32>,
    return
  }
  func.func @transform_0(%arg0: i32, %arg1: i32) -> (i32, i32, i32) {
    %c0_i32 = arith.constant 0 : i32
    %c0_i32_0 = arith.constant 0 : i32
    return %arg0, %c0_i32, %arg1 : i32, i32, i32
  }
  func.func @transform_1(%arg0: i32, %arg1: i32) -> (i32, i32) {
    %c0_i32 = arith.constant 0 : i32
    %c0_i32_0 = arith.constant 0 : i32
    %c0_i32_1 = arith.constant 0 : i32
    return %c0_i32, %c0_i32_0 : i32, i32
  }
  func.func @transform_2(%arg0: i32, %arg1: i32) -> (i32, i32) {
    %c0_i32 = arith.constant 0 : i32
    %c0_i32_0 = arith.constant 0 : i32
    %c0_i32_1 = arith.constant 0 : i32
    return %c0_i32, %c0_i32_0 : i32, i32
  }
  func.func @transform_3(%arg0: i32, %arg1: i32) -> (i32, i32, i32) {
    %c0_i32 = arith.constant 0 : i32
    %c0_i32_0 = arith.constant 0 : i32
    return %arg0, %c0_i32, %arg1 : i32, i32, i32
  }
}

</mosaic_0001>

<llo_original>
// kernel: outconv_forward.1
$region0: #{outconv_forward.1}
  #allocation0 [shape = 'u32[]', space=smem, size = 0x4, offset = 0x4, fixed_abs, tag = 'smem constant byte address 0x4 - core index']
  #allocation1 [shape = 'u32[144,128]{1,0:T(1,128)}', space=vmem, size = 0x12000, scoped, tag = 'internal scratch']
  %s0 = inlined_call_operand.vmem [shape: f32[2,4,256], index: 0, kind: input, shape index: {}]
  %s1 = inlined_call_operand.vmem [shape: f32[3,4], index: 1, kind: input, shape index: {}]
  %s2 = inlined_call_operand.vmem [shape: f32[3,1], index: 2, kind: input, shape index: {}]
  %s3 = inlined_call_operand.vmem [shape: f32[2,3,256], index: 3, kind: output, shape index: {}]
  %s4 = sld [smem:[#allocation0]]
  $region45: #{outconv_forward.1} parent=0
    _
  %s6 = ssub.s32 1, %s4
  %s7 = scalar_select 0, %s6, %s4
  loop: start=0, step=1, limit=6
  $region2: #{outconv_forward.1} parent=0 // loop_pre_header
    _
  $region3: #{outconv_forward.1} parent=0 // loop_header
    %s9 = sphi 0, %s13
    %p10 = scmp.ge.s32.totalorder %s9, 6
    %s16 = sphi 0, %s28
    %s17 = sphi 0, %s24
    %s18 = sphi 0, %s16
    %s19 = sphi 0, %s17
    %s20 = sphi 0, %s18
    %s21 = sphi 0, %s19
    %s33 = sphi 0, %s35
    %s36 = sphi 0, %s33
    %s37 = sphi 0, %s36
    %s53 = sphi 0, %s37
    %s57 = sphi 0, %s57
    %s59 = sphi 0, %s57
    %s60 = sphi 0, %s59
    %s74 = sphi 0, %s60
    %s78 = sphi 0, %s78
    %s80 = sphi 0, %s78
    %s81 = sphi 0, %s80
    %s95 = sphi 0, %s81
    %s103 = sphi 0, %s105
    %s106 = sphi 0, %s103
    %s107 = sphi 0, %s106
    %s123 = sphi 0, %s107
  $region4: #{outconv_forward.1} parent=0 // loop_header_branch
    %12 = sbr.rel (%p10) target = $region8
  $region5: #{outconv_forward.1} parent=0 // loop_body
    %s14 = ssub.s32 %s9, 1
    %s15 = ssub.s32 %s9, 2
    %s22 = sadd.s32 1, %s17
    %p23 = scmp.ge.s32.totalorder %s22, 2
    %s24 = scalar_select %p23, 0, %s22
    %s25 = sadd.s32 1, %s16
    %s26 = scalar_select %p23, %s25, %s16
    %p27 = scmp.ge.s32.totalorder %s26, 2
    %s28 = scalar_select %p27, 0, %s26
    %s29 = ssub.s32 %s16, %s28
    %s30 = ssub.s32 %s17, %s24
    %s31 = sor.u32 %s29, %s30
    %p32 = scmp.eq.s32.totalorder %s31, 0
    %s34 = sadd.s32 %s33, 1
    %s35 = scalar_select %p32, %s33, %s34
    %p38 = pneg %p32
    %p39 = scmp.eq.s32.totalorder %s9, 3
    %p40 = por %p38, %p39
    %p41 = scmp.ne.s32.totalorder %s33, %s36
    %p42 = scmp.eq.s32.totalorder %s9, 0
    %p43 = por %p41, %p42
    %p44 = scmp.ne.s32.totalorder %s33, %s36
    %p45 = scmp.eq.s32.totalorder %s14, 3
    %p46 = por %p44, %p45
    %p47 = scmp.ne.s32.totalorder %s36, %s37
    %p48 = scmp.eq.s32.totalorder %s14, 0
    %p49 = por %p47, %p48
    %p50 = scmp.ne.s32.totalorder %s36, %s37
    %p51 = scmp.eq.s32.totalorder %s15, 3
    %p52 = por %p50, %p51
    %p54 = scmp.ne.s32.totalorder %s37, %s53
    %p55 = scmp.eq.s32.totalorder %s15, 0
    %p56 = por %p54, %p55
    %s58 = sadd.s32 %s57, 1
    %p61 = scmp.eq.s32.totalorder %s9, 3
    %p62 = scmp.ne.s32.totalorder %s57, %s59
    %p63 = scmp.eq.s32.totalorder %s9, 0
    %p64 = por %p62, %p63
    %p65 = scmp.ne.s32.totalorder %s57, %s59
    %p66 = scmp.eq.s32.totalorder %s14, 3
    %p67 = por %p65, %p66
    %p68 = scmp.ne.s32.totalorder %s59, %s60
    %p69 = scmp.eq.s32.totalorder %s14, 0
    %p70 = por %p68, %p69
    %p71 = scmp.ne.s32.totalorder %s59, %s60
    %p72 = scmp.eq.s32.totalorder %s15, 3
    %p73 = por %p71, %p72
    %p75 = scmp.ne.s32.totalorder %s60, %s74
    %p76 = scmp.eq.s32.totalorder %s15, 0
    %p77 = por %p75, %p76
    %s79 = sadd.s32 %s78, 1
    %p82 = scmp.eq.s32.totalorder %s9, 3
    %p83 = scmp.ne.s32.totalorder %s78, %s80
    %p84 = scmp.eq.s32.totalorder %s9, 0
    %p85 = por %p83, %p84
    %p86 = scmp.ne.s32.totalorder %s78, %s80
    %p87 = scmp.eq.s32.totalorder %s14, 3
    %p88 = por %p86, %p87
    %p89 = scmp.ne.s32.totalorder %s80, %s81
    %p90 = scmp.eq.s32.totalorder %s14, 0
    %p91 = por %p89, %p90
    %p92 = scmp.ne.s32.totalorder %s80, %s81
    %p93 = scmp.eq.s32.totalorder %s15, 3
    %p94 = por %p92, %p93
    %p96 = scmp.ne.s32.totalorder %s81, %s95
    %p97 = scmp.eq.s32.totalorder %s15, 0
    %p98 = por %p96, %p97
    %s99 = ssub.s32 %s16, %s28
    %s100 = ssub.s32 %s17, %s24
    %s101 = sor.u32 %s99, %s100
    %p102 = scmp.eq.s32.totalorder %s101, 0
    %s104 = sadd.s32 %s103, 1
    %s105 = scalar_select %p102, %s103, %s104
    %p108 = pneg %p102
    %p109 = scmp.eq.s32.totalorder %s9, 3
    %p110 = por %p108, %p109
    %p111 = scmp.ne.s32.totalorder %s103, %s106
    %p112 = scmp.eq.s32.totalorder %s9, 0
    %p113 = por %p111, %p112
    %p114 = scmp.ne.s32.totalorder %s103, %s106
    %p115 = scmp.eq.s32.totalorder %s14, 3
    %p116 = por %p114, %p115
    %p117 = scmp.ne.s32.totalorder %s106, %s107
    %p118 = scmp.eq.s32.totalorder %s14, 0
    %p119 = por %p117, %p118
    %p120 = scmp.ne.s32.totalorder %s106, %s107
    %p121 = scmp.eq.s32.totalorder %s15, 3
    %p122 = por %p120, %p121
    %p124 = scmp.ne.s32.totalorder %s107, %s123
    %p125 = scmp.eq.s32.totalorder %s15, 0
    %p126 = por %p124, %p125
    %p127 = scmp.le.s32.totalorder 1, %s9
    %p128 = scmp.lt.s32.totalorder %s9, 5
    %p129 = pnand %p127, %p128
    %p130 = pneg %p129
    // Predicated region
    $region9: #{outconv_forward.1} parent=5 // pred_check
      _
    $region10: #{outconv_forward.1} parent=5 // pred_check_branch
      %132 = sbr.rel (%p129) target = $region12
    $region11: #{outconv_forward.1} parent=5 // pred_region
      %s133 = ssub.s32 %s9, 1
      // Predicated region
      $region13: #{outconv_forward.1} parent=11 // pred_check
        %p134 = pneg %p70
      $region14: #{outconv_forward.1} parent=11 // pred_check_branch
        %136 = sbr.rel (%p134) target = $region16
      $region15: #{outconv_forward.1} parent=11 // pred_region
        _
      $region16: #{outconv_forward.1} parent=11 // pred_fallthru
        _
      // Predicated region
      $region17: #{outconv_forward.1} parent=11 // pred_check
        %p137 = pneg %p91
      $region18: #{outconv_forward.1} parent=11 // pred_check_branch
        %139 = sbr.rel (%p137) target = $region20
      $region19: #{outconv_forward.1} parent=11 // pred_region
        _
      $region20: #{outconv_forward.1} parent=11 // pred_fallthru
        _
    $region12: #{outconv_forward.1} parent=5 // pred_fallthru
      _
    %p140 = scmp.lt.s32.totalorder %s9, 4
    // Predicated region
    $region21: #{outconv_forward.1} parent=5 // pred_check
      %p141 = pneg %p140
    $region22: #{outconv_forward.1} parent=5 // pred_check_branch
      %143 = sbr.rel (%p141) target = $region24
    $region23: #{outconv_forward.1} parent=5 // pred_region
      // Predicated region
      $region25: #{outconv_forward.1} parent=23 // pred_check
        %p144 = pneg %p43
      $region26: #{outconv_forward.1} parent=23 // pred_check_branch
        %146 = sbr.rel (%p144) target = $region28
      $region27: #{outconv_forward.1} parent=23 // pred_region
        %p147 = scmp.lt.s32.totalorder %s16, 1
        %s148 = scalar_select %p147, %s16, 1
        %p149 = scmp.lt.s32.totalorder %s17, 1
        %s150 = scalar_select %p149, %s17, 1
        %s151 = smul.addr %s148, 2
        %s152 = sadd.s32 %s150, %s151
        %s153 = smul.addr %s152, 4
        %s154 = scalar_lea.vmem %s0, %s153
      $region28: #{outconv_forward.1} parent=23 // pred_fallthru
        _
    $region24: #{outconv_forward.1} parent=5 // pred_fallthru
      _
    %p155 = scmp.le.s32.totalorder 1, %s9
    %p156 = scmp.lt.s32.totalorder %s9, 5
    %p157 = pnand %p155, %p156
    %p158 = pneg %p157
    // Predicated region
    $region29: #{outconv_forward.1} parent=5 // pred_check
      _
    $region30: #{outconv_forward.1} parent=5 // pred_check_branch
      %160 = sbr.rel (%p157) target = $region32
    $region31: #{outconv_forward.1} parent=5 // pred_region
      %s161 = ssub.s32 %s9, 1
      %p162 = scmp.lt.s32.totalorder %s18, 1
      %s163 = scalar_select %p162, %s18, 1
      %p164 = scmp.lt.s32.totalorder %s19, 1
      %s165 = scalar_select %p164, %s19, 1
      %s166 = smul.addr %s163, 2
      %s167 = sadd.s32 %s165, %s166
      %s168 = smul.addr %s167, 4
      %s169 = scalar_lea.vmem %s0, %s168
      %p170 = pneg %p49
      %p171 = pneg %p46
      %p172 = pneg %p70
      %p173 = pneg %p67
      %p174 = pneg %p91
      %p175 = pneg %p88
      %p176 = pneg %p119
      %p177 = pneg %p116
      %p178 = scmp.lt.s32.totalorder %s18, 1
      %s179 = scalar_select %p178, %s18, 1
      %p180 = scmp.lt.s32.totalorder %s19, 1
      %s181 = scalar_select %p180, %s19, 1
      %s182 = smul.addr %s179, 2
      %s183 = sadd.s32 %s181, %s182
      %s184 = smul.addr %s183, 4
      %s185 = scalar_lea.vmem %s3, %s184
      %p186 = scmp.lt.s32.totalorder %s18, 1
      %s187 = scalar_select %p186, %s18, 1
      %p188 = scmp.lt.s32.totalorder %s19, 1
      %s189 = scalar_select %p188, %s19, 1
      %s190 = smul.addr %s187, 2
      %s191 = sadd.s32 %s189, %s190
      %s192 = smul.addr %s191, 4
      %s193 = scalar_lea.vmem %s0, %s192
      %p194 = scmp.lt.s32.totalorder %s18, 1
      %s195 = scalar_select %p194, %s18, 1
      %p196 = scmp.lt.s32.totalorder %s19, 1
      %s197 = scalar_select %p196, %s19, 1
      %s198 = smul.addr %s195, 2
      %s199 = sadd.s32 %s197, %s198
      %s200 = smul.addr %s199, 4
      %s201 = scalar_lea.vmem %s3, %s200
      %v202 = vld [vmem:[%s1] sm:$0x7]
      %v203 = vld [vmem:[%s193] sm:$0xf]
      %v204 = vld [vmem:[%s2] sm:$0x7]
      %206 = vset.pattern.permute.xlu0 0
      %207 = vperm.xlu0 %206, %v204
      %v208 = vpop.permute.xlu0 %207
      %vm210 = vcmask 31744
      %v212 = vsel %vm210, %v202, 0
      %vm214 = vcmask 1043456
      %v216 = vsel %vm214, %v203, 0
      %218 = vmatprep.subr.mxu0 0.0
      %v219 = vand.u32 %v216, 4294901760
      %220 = vmatpush1.msra.mxu0 %v219
      %221 = vmatprep.subr.mxu0 0.0
      %222 = vmatpush1.msra.mxu0 0.0
      %223 = vmatprep.subr.mxu0 0.0
      %224 = vmatpush1.msra.mxu0 0.0
      %225 = vmatprep.subr.mxu0 0.0
      %226 = vmatpush1.msra.mxu0 0.0
      %227 = vmatprep.subr.mxu0 0.0
      %228 = vmatpush1.msra.mxu0 0.0
      %229 = vmatprep.subr.mxu0 0.0
      %230 = vmatpush1.msra.mxu0 0.0
      %231 = vmatprep.subr.mxu0 0.0
      %232 = vmatpush1.msra.mxu0 0.0
      %233 = vmatprep.subr.mxu0 0.0
      %234 = vmatpush1.msra.mxu0 0.0
      %235 = vmatprep.subr.mxu0 0.0
      %236 = vmatpush1.msra.mxu0 0.0
      %237 = vmatprep.subr.mxu0 0.0
      %238 = vmatpush1.msra.mxu0 0.0
      %239 = vmatprep.subr.mxu0 0.0
      %240 = vmatpush1.msra.mxu0 0.0
      %241 = vmatprep.subr.mxu0 0.0
      %242 = vmatpush1.msra.mxu0 0.0
      %243 = vmatprep.subr.mxu0 0.0
      %244 = vmatpush1.msra.mxu0 0.0
      %245 = vmatprep.subr.mxu0 0.0
      %246 = vmatpush1.msra.mxu0 0.0
      %247 = vmatprep.subr.mxu0 0.0
      %248 = vmatpush1.msra.mxu0 0.0
      %249 = vmatprep.subr.mxu0 0.0
      %250 = vmatpush1.msra.mxu0 0.0
      %251 = vmatprep.subr.mxu0 0.0
      %252 = vmatpush1.msra.mxu0 0.0
      %253 = vmatprep.subr.mxu0 0.0
      %254 = vmatpush1.msra.mxu0 0.0
      %255 = vmatprep.subr.mxu0 0.0
      %256 = vmatpush1.msra.mxu0 0.0
      %257 = vmatprep.subr.mxu0 0.0
      %258 = vmatpush1.msra.mxu0 0.0
      %259 = vmatprep.subr.mxu0 0.0
      %260 = vmatpush1.msra.mxu0 0.0
      %261 = vmatprep.subr.mxu0 0.0
      %262 = vmatpush1.msra.mxu0 0.0
      %263 = vmatprep.subr.mxu0 0.0
      %264 = vmatpush1.msra.mxu0 0.0
      %265 = vmatprep.subr.mxu0 0.0
      %266 = vmatpush1.msra.mxu0 0.0
      %267 = vmatprep.subr.mxu0 0.0
      %268 = vmatpush1.msra.mxu0 0.0
      %269 = vmatprep.subr.mxu0 0.0
      %270 = vmatpush1.msra.mxu0 0.0
      %271 = vmatprep.subr.mxu0 0.0
      %272 = vmatpush1.msra.mxu0 0.0
      %273 = vmatprep.subr.mxu0 0.0
      %274 = vmatpush1.msra.mxu0 0.0
      %275 = vmatprep.subr.mxu0 0.0
      %276 = vmatpush1.msra.mxu0 0.0
      %277 = vmatprep.subr.mxu0 0.0
      %278 = vmatpush1.msra.mxu0 0.0
      %279 = vmatprep.subr.mxu0 0.0
      %280 = vmatpush1.msra.mxu0 0.0
      %281 = vmatprep.subr.mxu0 0.0
      %282 = vmatpush1.msra.mxu0 0.0
      %283 = vmatprep.mubr.f32.mxu0 0.0
      %v284 = vand.u32 %v212, 4294901760
      %v285 = vsub.f32 %v212, %v284
      %v286 = vand.u32 %v285, 4294901760
      %v287 = vsub.f32 %v285, %v286
      %v288 = vand.u32 %v287, 4294901760
      %289 = vmatmul.mubr.f32.gmra.mrb[0].mxu0 %v288
      %v290 = vpop.f32.mrb[0].mxu0
      %v291 = vadd.f32 %v208, %v290
      %v292 = vpop.f32.mrb[0].mxu0
      %293 = vdwg.mxu0
      %294 = vmatprep.subr.mxu0 0.0
      %v295 = vand.u32 %v216, 4294901760
      %v296 = vsub.f32 %v216, %v295
      %v297 = vand.u32 %v296, 4294901760
      %v298 = vsub.f32 %v296, %v297
      %v299 = vand.u32 %v298, 4294901760
      %300 = vmatpush1.msra.mxu0 %v299
      %301 = vmatprep.subr.mxu0 0.0
      %302 = vmatpush1.msra.mxu0 0.0
      %303 = vmatprep.subr.mxu0 0.0
      %304 = vmatpush1.msra.mxu0 0.0
      %305 = vmatprep.subr.mxu0 0.0
      %306 = vmatpush1.msra.mxu0 0.0
      %307 = vmatprep.subr.mxu0 0.0
      %308 = vmatpush1.msra.mxu0 0.0
      %309 = vmatprep.subr.mxu0 0.0
      %310 = vmatpush1.msra.mxu0 0.0
      %311 = vmatprep.subr.mxu0 0.0
      %312 = vmatpush1.msra.mxu0 0.0
      %313 = vmatprep.subr.mxu0 0.0
      %314 = vmatpush1.msra.mxu0 0.0
      %315 = vmatprep.subr.mxu0 0.0
      %316 = vmatpush1.msra.mxu0 0.0
      %317 = vmatprep.subr.mxu0 0.0
      %318 = vmatpush1.msra.mxu0 0.0
      %319 = vmatprep.subr.mxu0 0.0
      %320 = vmatpush1.msra.mxu0 0.0
      %321 = vmatprep.subr.mxu0 0.0
      %322 = vmatpush1.msra.mxu0 0.0
      %323 = vmatprep.subr.mxu0 0.0
      %324 = vmatpush1.msra.mxu0 0.0
      %325 = vmatprep.subr.mxu0 0.0
      %326 = vmatpush1.msra.mxu0 0.0
      %327 = vmatprep.subr.mxu0 0.0
      %328 = vmatpush1.msra.mxu0 0.0
      %329 = vmatprep.subr.mxu0 0.0
      %330 = vmatpush1.msra.mxu0 0.0
      %331 = vmatprep.subr.mxu0 0.0
      %332 = vmatpush1.msra.mxu0 0.0
      %333 = vmatprep.subr.mxu0 0.0
      %334 = vmatpush1.msra.mxu0 0.0
      %335 = vmatprep.subr.mxu0 0.0
      %336 = vmatpush1.msra.mxu0 0.0
      %337 = vmatprep.subr.mxu0 0.0
      %338 = vmatpush1.msra.mxu0 0.0
      %339 = vmatprep.subr.mxu0 0.0
      %340 = vmatpush1.msra.mxu0 0.0
      %341 = vmatprep.subr.mxu0 0.0
      %342 = vmatpush1.msra.mxu0 0.0
      %343 = vmatprep.subr.mxu0 0.0
      %344 = vmatpush1.msra.mxu0 0.0
      %345 = vmatprep.subr.mxu0 0.0
      %346 = vmatpush1.msra.mxu0 0.0
      %347 = vmatprep.subr.mxu0 0.0
      %348 = vmatpush1.msra.mxu0 0.0
      %349 = vmatprep.subr.mxu0 0.0
      %350 = vmatpush1.msra.mxu0 0.0
      %351 = vmatprep.subr.mxu0 0.0
      %352 = vmatpush1.msra.mxu0 0.0
      %353 = vmatprep.subr.mxu0 0.0
      %354 = vmatpush1.msra.mxu0 0.0
      %355 = vmatprep.subr.mxu0 0.0
      %356 = vmatpush1.msra.mxu0 0.0
      %357 = vmatprep.subr.mxu0 0.0
      %358 = vmatpush1.msra.mxu0 0.0
      %359 = vmatprep.subr.mxu0 0.0
      %360 = vmatpush1.msra.mxu0 0.0
      %361 = vmatprep.subr.mxu0 0.0
      %362 = vmatpush1.msra.mxu0 0.0
      %363 = vmatprep.mubr.f32.mxu0 0.0
      %v364 = vand.u32 %v212, 4294901760
      %365 = vmatmul.mubr.f32.gmra.mrb[0].mxu0 %v364
      %v366 = vpop.f32.mrb[0].mxu0
      %v367 = vadd.f32 %v291, %v366
      %v368 = vpop.f32.mrb[0].mxu0
      %369 = vdwg.mxu0
      %370 = vmatprep.subr.mxu0 0.0
      %v371 = vand.u32 %v216, 4294901760
      %v372 = vsub.f32 %v216, %v371
      %373 = vmatpush1.msra.mxu0 %v372
      %374 = vmatprep.subr.mxu0 0.0
      %375 = vmatpush1.msra.mxu0 0.0
      %376 = vmatprep.subr.mxu0 0.0
      %377 = vmatpush1.msra.mxu0 0.0
      %378 = vmatprep.subr.mxu0 0.0
      %379 = vmatpush1.msra.mxu0 0.0
      %380 = vmatprep.subr.mxu0 0.0
      %381 = vmatpush1.msra.mxu0 0.0
      %382 = vmatprep.subr.mxu0 0.0
      %383 = vmatpush1.msra.mxu0 0.0
      %384 = vmatprep.subr.mxu0 0.0
      %385 = vmatpush1.msra.mxu0 0.0
      %386 = vmatprep.subr.mxu0 0.0
      %387 = vmatpush1.msra.mxu0 0.0
      %388 = vmatprep.subr.mxu0 0.0
      %389 = vmatpush1.msra.mxu0 0.0
      %390 = vmatprep.subr.mxu0 0.0
      %391 = vmatpush1.msra.mxu0 0.0
      %392 = vmatprep.subr.mxu0 0.0
      %393 = vmatpush1.msra.mxu0 0.0
      %394 = vmatprep.subr.mxu0 0.0
      %395 = vmatpush1.msra.mxu0 0.0
      %396 = vmatprep.subr.mxu0 0.0
      %397 = vmatpush1.msra.mxu0 0.0
      %398 = vmatprep.subr.mxu0 0.0
      %399 = vmatpush1.msra.mxu0 0.0
      %400 = vmatprep.subr.mxu0 0.0
      %401 = vmatpush1.msra.mxu0 0.0
      %402 = vmatprep.subr.mxu0 0.0
      %403 = vmatpush1.msra.mxu0 0.0
      %404 = vmatprep.subr.mxu0 0.0
      %405 = vmatpush1.msra.mxu0 0.0
      %406 = vmatprep.subr.mxu0 0.0
      %407 = vmatpush1.msra.mxu0 0.0
      %408 = vmatprep.subr.mxu0 0.0
      %409 = vmatpush1.msra.mxu0 0.0
      %410 = vmatprep.subr.mxu0 0.0
      %411 = vmatpush1.msra.mxu0 0.0
      %412 = vmatprep.subr.mxu0 0.0
      %413 = vmatpush1.msra.mxu0 0.0
      %414 = vmatprep.subr.mxu0 0.0
      %415 = vmatpush1.msra.mxu0 0.0
      %416 = vmatprep.subr.mxu0 0.0
      %417 = vmatpush1.msra.mxu0 0.0
      %418 = vmatprep.subr.mxu0 0.0
      %419 = vmatpush1.msra.mxu0 0.0
      %420 = vmatprep.subr.mxu0 0.0
      %421 = vmatpush1.msra.mxu0 0.0
      %422 = vmatprep.subr.mxu0 0.0
      %423 = vmatpush1.msra.mxu0 0.0
      %424 = vmatprep.subr.mxu0 0.0
      %425 = vmatpush1.msra.mxu0 0.0
      %426 = vmatprep.subr.mxu0 0.0
      %427 = vmatpush1.msra.mxu0 0.0
      %428 = vmatprep.subr.mxu0 0.0
      %429 = vmatpush1.msra.mxu0 0.0
      %430 = vmatprep.subr.mxu0 0.0
      %431 = vmatpush1.msra.mxu0 0.0
      %432 = vmatprep.subr.mxu0 0.0
      %433 = vmatpush1.msra.mxu0 0.0
      %434 = vmatprep.subr.mxu0 0.0
      %435 = vmatpush1.msra.mxu0 0.0
      %436 = vmatprep.mubr.f32.mxu0 0.0
      %v437 = vand.u32 %v212, 4294901760
      %v438 = vsub.f32 %v212, %v437
      %439 = vmatmul.mubr.f32.gmra.mrb[0].mxu0 %v438
      %v440 = vpop.f32.mrb[0].mxu0
      %v441 = vadd.f32 %v367, %v440
      %v442 = vpop.f32.mrb[0].mxu0
      %443 = vdwg.mxu0
      %444 = vmatprep.subr.mxu0 0.0
      %v445 = vand.u32 %v216, 4294901760
      %446 = vmatpush1.msra.mxu0 %v445
      %447 = vmatprep.subr.mxu0 0.0
      %448 = vmatpush1.msra.mxu0 0.0
      %449 = vmatprep.subr.mxu0 0.0
      %450 = vmatpush1.msra.mxu0 0.0
      %451 = vmatprep.subr.mxu0 0.0
      %452 = vmatpush1.msra.mxu0 0.0
      %453 = vmatprep.subr.mxu0 0.0
      %454 = vmatpush1.msra.mxu0 0.0
      %455 = vmatprep.subr.mxu0 0.0
      %456 = vmatpush1.msra.mxu0 0.0
      %457 = vmatprep.subr.mxu0 0.0
      %458 = vmatpush1.msra.mxu0 0.0
      %459 = vmatprep.subr.mxu0 0.0
      %460 = vmatpush1.msra.mxu0 0.0
      %461 = vmatprep.subr.mxu0 0.0
      %462 = vmatpush1.msra.mxu0 0.0
      %463 = vmatprep.subr.mxu0 0.0
      %464 = vmatpush1.msra.mxu0 0.0
      %465 = vmatprep.subr.mxu0 0.0
      %466 = vmatpush1.msra.mxu0 0.0
      %467 = vmatprep.subr.mxu0 0.0
      %468 = vmatpush1.msra.mxu0 0.0
      %469 = vmatprep.subr.mxu0 0.0
      %470 = vmatpush1.msra.mxu0 0.0
      %471 = vmatprep.subr.mxu0 0.0
      %472 = vmatpush1.msra.mxu0 0.0
      %473 = vmatprep.subr.mxu0 0.0
      %474 = vmatpush1.msra.mxu0 0.0
      %475 = vmatprep.subr.mxu0 0.0
      %476 = vmatpush1.msra.mxu0 0.0
      %477 = vmatprep.subr.mxu0 0.0
      %478 = vmatpush1.msra.mxu0 0.0
      %479 = vmatprep.subr.mxu0 0.0
      %480 = vmatpush1.msra.mxu0 0.0
      %481 = vmatprep.subr.mxu0 0.0
      %482 = vmatpush1.msra.mxu0 0.0
      %483 = vmatprep.subr.mxu0 0.0
      %484 = vmatpush1.msra.mxu0 0.0
      %485 = vmatprep.subr.mxu0 0.0
      %486 = vmatpush1.msra.mxu0 0.0
      %487 = vmatprep.subr.mxu0 0.0
      %488 = vmatpush1.msra.mxu0 0.0
      %489 = vmatprep.subr.mxu0 0.0
      %490 = vmatpush1.msra.mxu0 0.0
      %491 = vmatprep.subr.mxu0 0.0
      %492 = vmatpush1.msra.mxu0 0.0
      %493 = vmatprep.subr.mxu0 0.0
      %494 = vmatpush1.msra.mxu0 0.0
      %495 = vmatprep.subr.mxu0 0.0
      %496 = vmatpush1.msra.mxu0 0.0
      %497 = vmatprep.subr.mxu0 0.0
      %498 = vmatpush1.msra.mxu0 0.0
      %499 = vmatprep.subr.mxu0 0.0
      %500 = vmatpush1.msra.mxu0 0.0
      %501 = vmatprep.subr.mxu0 0.0
      %502 = vmatpush1.msra.mxu0 0.0
      %503 = vmatprep.subr.mxu0 0.0
      %504 = vmatpush1.msra.mxu0 0.0
      %505 = vmatprep.subr.mxu0 0.0
      %506 = vmatpush1.msra.mxu0 0.0
      %507 = vmatprep.subr.mxu0 0.0
      %508 = vmatpush1.msra.mxu0 0.0
      %509 = vmatprep.mubr.f32.mxu0 0.0
      %v510 = vand.u32 %v212, 4294901760
      %v511 = vsub.f32 %v212, %v510
      %v512 = vand.u32 %v511, 4294901760
      %513 = vmatmul.mubr.f32.gmra.mrb[0].mxu0 %v512
      %v514 = vpop.f32.mrb[0].mxu0
      %v515 = vadd.f32 %v441, %v514
      %v516 = vpop.f32.mrb[0].mxu0
      %517 = vdwg.mxu0
      %518 = vmatprep.subr.mxu0 0.0
      %v519 = vand.u32 %v216, 4294901760
      %v520 = vsub.f32 %v216, %v519
      %v521 = vand.u32 %v520, 4294901760
      %522 = vmatpush1.msra.mxu0 %v521
      %523 = vmatprep.subr.mxu0 0.0
      %524 = vmatpush1.msra.mxu0 0.0
      %525 = vmatprep.subr.mxu0 0.0
      %526 = vmatpush1.msra.mxu0 0.0
      %527 = vmatprep.subr.mxu0 0.0
      %528 = vmatpush1.msra.mxu0 0.0
      %529 = vmatprep.subr.mxu0 0.0
      %530 = vmatpush1.msra.mxu0 0.0
      %531 = vmatprep.subr.mxu0 0.0
      %532 = vmatpush1.msra.mxu0 0.0
      %533 = vmatprep.subr.mxu0 0.0
      %534 = vmatpush1.msra.mxu0 0.0
      %535 = vmatprep.subr.mxu0 0.0
      %536 = vmatpush1.msra.mxu0 0.0
      %537 = vmatprep.subr.mxu0 0.0
      %538 = vmatpush1.msra.mxu0 0.0
      %539 = vmatprep.subr.mxu0 0.0
      %540 = vmatpush1.msra.mxu0 0.0
      %541 = vmatprep.subr.mxu0 0.0
      %542 = vmatpush1.msra.mxu0 0.0
      %543 = vmatprep.subr.mxu0 0.0
      %544 = vmatpush1.msra.mxu0 0.0
      %545 = vmatprep.subr.mxu0 0.0
      %546 = vmatpush1.msra.mxu0 0.0
      %547 = vmatprep.subr.mxu0 0.0
      %548 = vmatpush1.msra.mxu0 0.0
      %549 = vmatprep.subr.mxu0 0.0
      %550 = vmatpush1.msra.mxu0 0.0
      %551 = vmatprep.subr.mxu0 0.0
      %552 = vmatpush1.msra.mxu0 0.0
      %553 = vmatprep.subr.mxu0 0.0
      %554 = vmatpush1.msra.mxu0 0.0
      %555 = vmatprep.subr.mxu0 0.0
      %556 = vmatpush1.msra.mxu0 0.0
      %557 = vmatprep.subr.mxu0 0.0
      %558 = vmatpush1.msra.mxu0 0.0
      %559 = vmatprep.subr.mxu0 0.0
      %560 = vmatpush1.msra.mxu0 0.0
      %561 = vmatprep.subr.mxu0 0.0
      %562 = vmatpush1.msra.mxu0 0.0
      %563 = vmatprep.subr.mxu0 0.0
      %564 = vmatpush1.msra.mxu0 0.0
      %565 = vmatprep.subr.mxu0 0.0
      %566 = vmatpush1.msra.mxu0 0.0
      %567 = vmatprep.subr.mxu0 0.0
      %568 = vmatpush1.msra.mxu0 0.0
      %569 = vmatprep.subr.mxu0 0.0
      %570 = vmatpush1.msra.mxu0 0.0
      %571 = vmatprep.subr.mxu0 0.0
      %572 = vmatpush1.msra.mxu0 0.0
      %573 = vmatprep.subr.mxu0 0.0
      %574 = vmatpush1.msra.mxu0 0.0
      %575 = vmatprep.subr.mxu0 0.0
      %576 = vmatpush1.msra.mxu0 0.0
      %577 = vmatprep.subr.mxu0 0.0
      %578 = vmatpush1.msra.mxu0 0.0
      %579 = vmatprep.subr.mxu0 0.0
      %580 = vmatpush1.msra.mxu0 0.0
      %581 = vmatprep.subr.mxu0 0.0
      %582 = vmatpush1.msra.mxu0 0.0
      %583 = vmatprep.subr.mxu0 0.0
      %584 = vmatpush1.msra.mxu0 0.0
      %585 = vmatprep.mubr.f32.mxu0 0.0
      %v586 = vand.u32 %v212, 4294901760
      %587 = vmatmul.mubr.f32.gmra.mrb[0].mxu0 %v586
      %v588 = vpop.f32.mrb[0].mxu0
      %v589 = vadd.f32 %v515, %v588
      %v590 = vpop.f32.mrb[0].mxu0
      %591 = vdwg.mxu0
      %592 = vmatprep.subr.mxu0 0.0
      %v593 = vand.u32 %v216, 4294901760
      %594 = vmatpush1.msra.mxu0 %v593
      %595 = vmatprep.subr.mxu0 0.0
      %596 = vmatpush1.msra.mxu0 0.0
      %597 = vmatprep.subr.mxu0 0.0
      %598 = vmatpush1.msra.mxu0 0.0
      %599 = vmatprep.subr.mxu0 0.0
      %600 = vmatpush1.msra.mxu0 0.0
      %601 = vmatprep.subr.mxu0 0.0
      %602 = vmatpush1.msra.mxu0 0.0
      %603 = vmatprep.subr.mxu0 0.0
      %604 = vmatpush1.msra.mxu0 0.0
      %605 = vmatprep.subr.mxu0 0.0
      %606 = vmatpush1.msra.mxu0 0.0
      %607 = vmatprep.subr.mxu0 0.0
      %608 = vmatpush1.msra.mxu0 0.0
      %609 = vmatprep.subr.mxu0 0.0
      %610 = vmatpush1.msra.mxu0 0.0
      %611 = vmatprep.subr.mxu0 0.0
      %612 = vmatpush1.msra.mxu0 0.0
      %613 = vmatprep.subr.mxu0 0.0
      %614 = vmatpush1.msra.mxu0 0.0
      %615 = vmatprep.subr.mxu0 0.0
      %616 = vmatpush1.msra.mxu0 0.0
      %617 = vmatprep.subr.mxu0 0.0
      %618 = vmatpush1.msra.mxu0 0.0
      %619 = vmatprep.subr.mxu0 0.0
      %620 = vmatpush1.msra.mxu0 0.0
      %621 = vmatprep.subr.mxu0 0.0
      %622 = vmatpush1.msra.mxu0 0.0
      %623 = vmatprep.subr.mxu0 0.0
      %624 = vmatpush1.msra.mxu0 0.0
      %625 = vmatprep.subr.mxu0 0.0
      %626 = vmatpush1.msra.mxu0 0.0
      %627 = vmatprep.subr.mxu0 0.0
      %628 = vmatpush1.msra.mxu0 0.0
      %629 = vmatprep.subr.mxu0 0.0
      %630 = vmatpush1.msra.mxu0 0.0
      %631 = vmatprep.subr.mxu0 0.0
      %632 = vmatpush1.msra.mxu0 0.0
      %633 = vmatprep.subr.mxu0 0.0
      %634 = vmatpush1.msra.mxu0 0.0
      %635 = vmatprep.subr.mxu0 0.0
      %636 = vmatpush1.msra.mxu0 0.0
      %637 = vmatprep.subr.mxu0 0.0
      %638 = vmatpush1.msra.mxu0 0.0
      %639 = vmatprep.subr.mxu0 0.0
      %640 = vmatpush1.msra.mxu0 0.0
      %641 = vmatprep.subr.mxu0 0.0
      %642 = vmatpush1.msra.mxu0 0.0
      %643 = vmatprep.subr.mxu0 0.0
      %644 = vmatpush1.msra.mxu0 0.0
      %645 = vmatprep.subr.mxu0 0.0
      %646 = vmatpush1.msra.mxu0 0.0
      %647 = vmatprep.subr.mxu0 0.0
      %648 = vmatpush1.msra.mxu0 0.0
      %649 = vmatprep.subr.mxu0 0.0
      %650 = vmatpush1.msra.mxu0 0.0
      %651 = vmatprep.subr.mxu0 0.0
      %652 = vmatpush1.msra.mxu0 0.0
      %653 = vmatprep.subr.mxu0 0.0
      %654 = vmatpush1.msra.mxu0 0.0
      %655 = vmatprep.subr.mxu0 0.0
      %656 = vmatpush1.msra.mxu0 0.0
      %657 = vmatprep.mubr.f32.mxu0 0.0
      %v658 = vand.u32 %v212, 4294901760
      %659 = vmatmul.mubr.f32.gmra.mrb[0].mxu0 %v658
      %v660 = vpop.f32.mrb[0].mxu0
      %v661 = vadd.f32 %v589, %v660
      %v662 = vpop.f32.mrb[0].mxu0
      %663 = vdwg.mxu0
      %664 = vst [vmem:[%s201] sm:$0x7] %v661
      %p665 = scmp.lt.s32.totalorder %s18, 1
      %s666 = scalar_select %p665, %s18, 1
      %p667 = scmp.lt.s32.totalorder %s19, 1
      %s668 = scalar_select %p667, %s19, 1
      %s669 = smul.addr %s666, 2
      %s670 = sadd.s32 %s668, %s669
      %s671 = smul.addr %s670, 4
      %s672 = scalar_lea.vmem %s3, %s671
      // Predicated region
      $region33: #{outconv_forward.1} parent=31 // pred_check
        %p673 = pneg %p116
      $region34: #{outconv_forward.1} parent=31 // pred_check_branch
        %675 = sbr.rel (%p673) target = $region36
      $region35: #{outconv_forward.1} parent=31 // pred_region
        _
      $region36: #{outconv_forward.1} parent=31 // pred_fallthru
        _
    $region32: #{outconv_forward.1} parent=5 // pred_fallthru
      _
    %p676 = scmp.le.s32.totalorder 2, %s9
    // Predicated region
    $region37: #{outconv_forward.1} parent=5 // pred_check
      %p677 = pneg %p676
    $region38: #{outconv_forward.1} parent=5 // pred_check_branch
      %679 = sbr.rel (%p677) target = $region40
    $region39: #{outconv_forward.1} parent=5 // pred_region
      %s680 = ssub.s32 %s9, 2
      // Predicated region
      $region41: #{outconv_forward.1} parent=39 // pred_check
        %p681 = pneg %p122
      $region42: #{outconv_forward.1} parent=39 // pred_check_branch
        %683 = sbr.rel (%p681) target = $region44
      $region43: #{outconv_forward.1} parent=39 // pred_region
        %p684 = scmp.lt.s32.totalorder %s20, 1
        %s685 = scalar_select %p684, %s20, 1
        %p686 = scmp.lt.s32.totalorder %s21, 1
        %s687 = scalar_select %p686, %s21, 1
        %s688 = smul.addr %s685, 2
        %s689 = sadd.s32 %s687, %s688
        %s690 = smul.addr %s689, 4
        %s691 = scalar_lea.vmem %s3, %s690
      $region44: #{outconv_forward.1} parent=39 // pred_fallthru
        _
    $region40: #{outconv_forward.1} parent=5 // pred_fallthru
      _
  $region6: #{outconv_forward.1} parent=0 // loop_footer
    %s13 = sadd.s32 1, %s9
  $region7: #{outconv_forward.1} parent=0 // loop_footer_branch
    %8 = sbr.rel target = $region3
  $region8: #{outconv_forward.1} parent=0 // loop_exit
    _

</llo_original>
